<compile_context>
chip_gen: v7x
topology: tpu7x:2x2x1
jax: 0.10.0
libtpu: 0.0.40
codegen_flags: <defaults>
</compile_context>

<pallas_src>
import math
import functools

import jax
import jax.numpy as jnp
from jax.experimental import pallas as pl
from jax.experimental.pallas import tpu as pltpu


# ----------------------------------------------------------------------------
# Buffer setup (plain JAX glue): the fixed sinusoidal table from __init__
# ----------------------------------------------------------------------------
def make_pe_table(max_len: int, d_model: int, dtype=jnp.float32) -> jax.Array:
    assert d_model % 2 == 0, "d_model must be even for the sin/cos interleave"
    position = jnp.arange(max_len, dtype=jnp.float32)[:, None]          # (L, 1)
    div_term = jnp.exp(
        jnp.arange(0, d_model, 2, dtype=jnp.float32)
        * (-math.log(10000.0) / d_model)
    )                                                                    # (D/2,)
    pe = jnp.zeros((max_len, d_model), jnp.float32)
    pe = pe.at[:, 0::2].set(jnp.sin(position * div_term))
    pe = pe.at[:, 1::2].set(jnp.cos(position * div_term))
    # unsqueeze(0).transpose(0, 1) -> (max_len, 1, d_model), like the PyTorch buffer
    return pe[:, None, :].astype(dtype)


# ----------------------------------------------------------------------------
# Kernels: x2d + tile(pe2d, B), optional inverted-dropout multiply
# ----------------------------------------------------------------------------
def posenc_eval_kernel(x_ref, pe_ref, o_ref, *, batch):
    # x_ref:  (tile_s, B*D)   pe_ref: (tile_s, D)
    pe_b = jnp.tile(pe_ref[...], (1, batch))          # lane-dim tile (XLU), free-ish
    o_ref[...] = (x_ref[...] + pe_b).astype(o_ref.dtype)


def posenc_dropout_kernel(x_ref, keep_ref, pe_ref, o_ref, *, batch, inv_keep):
    pe_b = jnp.tile(pe_ref[...], (1, batch))
    y = x_ref[...] + pe_b
    # Inverted dropout: keep_ref holds 0/1; kept values scaled by 1/(1-p).
    y = y * (keep_ref[...] * jnp.asarray(inv_keep, y.dtype))
    o_ref[...] = y.astype(o_ref.dtype)


# ----------------------------------------------------------------------------
# VMEM-budgeted tile selection
# ----------------------------------------------------------------------------
VMEM_LIMIT_BYTES = 48 * 1024 * 1024    # explicit scoped limit (fits v7x's 64 MiB,
                                       # above v5e/v6e 16/32 MiB defaults)
VMEM_BUDGET_BYTES = 28 * 1024 * 1024   # target working set (double-buffered blocks)


def _choose_tile_s(S: int, bytes_per_row: int, budget: int) -> int:
    """Largest seq tile that (a) divides S, (b) is sublane-aligned (mult of 8 or
    == S), (c) fits the VMEM budget; prefers >=2 grid steps for megacore."""
    cap = max(1, budget // max(1, bytes_per_row))
    cands = sorted({t for t in range(8, S + 1, 8) if S % t == 0} | {S})
    fitting = [t for t in cands if t <= cap]
    if not fitting:
        return cands[0]
    t = max(fitting)
    if S // t < 2:
        multi = [c for c in fitting if S // c >= 2]
        # only split if it doesn't shrink tiles below 1/4 of the budget-sized tile
        if multi and max(multi) * 4 >= t:
            t = max(multi)
    return t


# ----------------------------------------------------------------------------
# Wrapper
# ----------------------------------------------------------------------------
def positional_encoding(
    x: jax.Array,
    pe: jax.Array,
    *,
    dropout_p: float = 0.1,
    apply_dropout: bool = False,
    rng_key: jax.Array | None = None,
    tile_s: int | None = None,
) -> jax.Array:
    """x: (S, B, D); pe: (max_len, 1, D) or (max_len, D). Returns dropout(x + pe[:S])."""
    S, B, D = x.shape
    max_len = pe.shape[0]
    assert max_len >= S and pe.shape[-1] == D
    assert 0.0 <= dropout_p < 1.0, "dropout_p must be in [0, 1)"

    dtype = x.dtype
    itemsize = jnp.dtype(dtype).itemsize
    use_dropout = apply_dropout and dropout_p > 0.0

    # Free views (row-major contiguous): lane-dense 2-D layouts.
    x2d = x.reshape(S, B * D)
    pe2d = pe.reshape(max_len, D)            # full table; no [:S] copy

    # Per-seq-row VMEM footprint with double buffering:
    #   2 * (x block + out block) + 2 * pe block (+ 2 * mask block if dropout)
    bytes_per_row = (4 * B * D + 2 * D) * itemsize
    if use_dropout:
        bytes_per_row += 2 * B * D * itemsize
    if tile_s is None:
        tile_s = _choose_tile_s(S, bytes_per_row, VMEM_BUDGET_BYTES)
    assert S % tile_s == 0, "seq_len must be divisible by the seq tile"

    grid = (S // tile_s,)
    x_spec = pl.BlockSpec((tile_s, B * D), lambda i: (i, 0))
    pe_spec = pl.BlockSpec((tile_s, D), lambda i: (i, 0))

    compiler_params = pltpu.CompilerParams(
        dimension_semantics=("parallel",),
        vmem_limit_bytes=VMEM_LIMIT_BYTES,
    )
    out_shape = jax.ShapeDtypeStruct((S, B * D), dtype)

    if not use_dropout:
        out2d = pl.pallas_call(
            functools.partial(posenc_eval_kernel, batch=B),
            out_shape=out_shape,
            grid=grid,
            in_specs=[x_spec, pe_spec],
            out_specs=x_spec,
            compiler_params=compiler_params,
            input_output_aliases={0: 0},     # alias x -> output
        )(x2d, pe2d)
    else:
        if rng_key is None:
            rng_key = jax.random.PRNGKey(0)
        # NOTE: vary rng_key per call/layer/step; same key => same dropout mask.
        keep = jax.random.bernoulli(rng_key, 1.0 - dropout_p, (S, B * D)).astype(dtype)
        out2d = pl.pallas_call(
            functools.partial(
                posenc_dropout_kernel, batch=B, inv_keep=1.0 / (1.0 - dropout_p)
            ),
            out_shape=out_shape,
            grid=grid,
            in_specs=[x_spec, x_spec, pe_spec],
            out_specs=x_spec,
            compiler_params=compiler_params,
            input_output_aliases={0: 0},
        )(x2d, keep, pe2d)

    return out2d.reshape(S, B, D)


# ----------------------------------------------------------------------------
# Demo / correctness check
# ----------------------------------------------------------------------------
if __name__ == "__main__":
    SEQ, BATCH, D_MODEL = 8, 4, 128   # small shapes; D aligned to lane width
    MAX_LEN = 64                      # small stand-in for max_len=5000
    DROPOUT_P = 0.1

    key = jax.random.PRNGKey(0)
    x_key, drop_key = jax.random.split(key)
    x = jax.random.normal(x_key, (SEQ, BATCH, D_MODEL), dtype=jnp.float32)
    pe = make_pe_table(MAX_LEN, D_MODEL, dtype=jnp.float32)

    # --- Eval mode (dropout is identity): exact numerical check vs reference ---
    out_eval = positional_encoding(x, pe, dropout_p=DROPOUT_P, apply_dropout=False)
    out_eval = jax.block_until_ready(out_eval)

    ref_eval = x + pe[:SEQ]
    assert out_eval.shape == x.shape and out_eval.dtype == x.dtype
    assert jnp.allclose(out_eval, ref_eval, atol=1e-6, rtol=1e-6), "eval mismatch"

    # --- Training mode: inverted dropout with a deterministic key ---
    out_train = positional_encoding(
        x, pe, dropout_p=DROPOUT_P, apply_dropout=True, rng_key=drop_key
    )
    out_train = jax.block_until_ready(out_train)
    assert out_train.shape == x.shape and out_train.dtype == x.dtype

    # Rebuild the same keep-mask to check the dropout math exactly.
    keep_ref = jax.random.bernoulli(
        drop_key, 1.0 - DROPOUT_P, (SEQ, BATCH * D_MODEL)
    ).astype(x.dtype).reshape(SEQ, BATCH, D_MODEL)
    ref_train = (x + pe[:SEQ]) * (keep_ref * (1.0 / (1.0 - DROPOUT_P)))
    assert jnp.allclose(out_train, ref_train, atol=1e-6, rtol=1e-6), "train mismatch"

    drop_frac = float(jnp.mean(keep_ref == 0.0))
    assert 0.0 <= drop_frac < 0.5, "dropout fraction looks wrong"

    print("KERNEL_OK")
</pallas_src>

<mosaic_0001>
module attributes {stable_mosaic.version = 11 : i64} {
  func.func @posenc_eval_kernel(%arg0: i32, %arg1: memref<8x512xf32, #tpu.memory_space<vmem>>, %arg2: memref<8x128xf32, #tpu.memory_space<vmem>>, %arg3: memref<8x512xf32, #tpu.memory_space<vmem>>) attributes {dimension_semantics = [#tpu.dimension_semantics<parallel>], iteration_bounds = array<i64: 1>, scalar_prefetch = 0 : i64, scratch_operands = 0 : i64, tpu.core_type = #tpu.core_type<tc>, window_params = [{transform_indices = @transform_0, window_bounds = array<i64: 8, 512>}, {transform_indices = @transform_1, window_bounds = array<i64: 8, 128>}, {transform_indices = @transform_2, window_bounds = array<i64: 8, 512>}]} {
    %c0 = arith.constant 0 : index
    %c0_0 = arith.constant 0 : index
    %0 = vector.load %arg2[%c0, %c0_0] : memref<8x128xf32, #tpu.memory_space<vmem>>, vector<8x128xf32>
    %1 = tpu.concatenate %0, %0, %0, %0 in 1 : vector<8x128xf32>, vector<8x128xf32>, vector<8x128xf32>, vector<8x128xf32> -> vector<8x512xf32>
    %c0_1 = arith.constant 0 : index
    %c0_2 = arith.constant 0 : index
    %2 = vector.load %arg1[%c0_1, %c0_2] : memref<8x512xf32, #tpu.memory_space<vmem>>, vector<8x512xf32>
    %3 = arith.addf %2, %1 : vector<8x512xf32>
    %c0_3 = arith.constant 0 : index
    %c0_4 = arith.constant 0 : index
    %4 = vector.load %arg3[%c0_3, %c0_4] : memref<8x512xf32, #tpu.memory_space<vmem>>, vector<8x512xf32>
    tpu.vector_store %arg3[%c0_3, %c0_4], %3 {strides = array<i32>} : memref<8x512xf32, #tpu.memory_space<vmem>>, vector<8x512xf32>,
    return
  }
  func.func @transform_0(%arg0: i32) -> (i32, i32) {
    %c0_i32 = arith.constant 0 : i32
    %c0_i32_0 = arith.constant 0 : i32
    return %arg0, %c0_i32 : i32, i32
  }
  func.func @transform_1(%arg0: i32) -> (i32, i32) {
    %c0_i32 = arith.constant 0 : i32
    %c0_i32_0 = arith.constant 0 : i32
    return %arg0, %c0_i32 : i32, i32
  }
  func.func @transform_2(%arg0: i32) -> (i32, i32) {
    %c0_i32 = arith.constant 0 : i32
    %c0_i32_0 = arith.constant 0 : i32
    return %arg0, %c0_i32 : i32, i32
  }
}

</mosaic_0001>

<llo_original>
// kernel: tpu_custom_call.1
$region0: #{tpu_custom_call.1}
  #allocation0 [shape = 'u32[]', space=smem, size = 0x4, offset = 0x4, fixed_abs, tag = 'smem constant byte address 0x4 - core index']
  #allocation1 [shape = 'u32[144,128]{1,0:T(1,128)}', space=vmem, size = 0x12000, scoped, tag = 'internal scratch']
  %s0 = inlined_call_operand.hbm [shape: f32[8,512], index: 0, kind: input, shape index: {}, may-alias: {0,2}]
  %s1 = inlined_call_operand.vmem [shape: f32[64,128], index: 1, kind: input, shape index: {}]
  %s2 = inlined_call_operand.hbm [shape: f32[8,512], index: 2, kind: output, shape index: {}, may-alias: {0,2}]
  %s3 = sld [smem:[#allocation0]]
  $region22: #{tpu_custom_call.1} parent=0
    _
  %s5 = ssub.s32 1, %s3
  %s6 = scalar_select 0, %s5, %s3
  $region1: #{tpu_custom_call.1} parent=0
    #allocation2 [shape = 'u8[16384]{0}', space=vmem, size = 0x4000, scoped, tag = 'input window, operand 0, single buffered']
    #allocation3 [shape = 's32[1]{0}', space=sflag, size = 0x4, scoped, tag = 'scoped memory for tpu_custom_call.1']
    #allocation4 [shape = 's32[1]{0}', space=sflag, size = 0x4, scoped, tag = 'scoped memory for tpu_custom_call.1']
    #allocation5 [shape = 'u8[16384]{0}', space=vmem, size = 0x4000, scoped, tag = 'output window, operand 0, single buffered']
    %7 = vsyncpa [#allocation3], 0
    %8 = vsyncpa [#allocation4], 0
    // Predicated region
    $region2: #{tpu_custom_call.1} parent=1 // pred_check
      _
    $region3: #{tpu_custom_call.1} parent=1 // pred_check_branch
      %10 = sbr.rel (0) target = $region5
    $region4: #{tpu_custom_call.1} parent=1 // pred_region
      %s12 = ssub.s32 512, 512
      %13 = vsyncadd [#allocation3], %s12
      %s15 = sshll.u32 [#allocation2], 4
      %s16 = int_to_ptr.vmem [resolvable:$true] %s15
      %18 = dma.hbm_to_vmem [thread:$0]  %s0, 512, %s16, [#allocation3]
    $region5: #{tpu_custom_call.1} parent=1 // pred_fallthru
      _
    // Predicated region
    $region6: #{tpu_custom_call.1} parent=1 // pred_check
      _
    $region7: #{tpu_custom_call.1} parent=1 // pred_check_branch
      %20 = sbr.rel (0) target = $region9
    $region8: #{tpu_custom_call.1} parent=1 // pred_region
      _
    $region9: #{tpu_custom_call.1} parent=1 // pred_fallthru
      _
    // Predicated region
    $region10: #{tpu_custom_call.1} parent=1 // pred_check
      _
    $region11: #{tpu_custom_call.1} parent=1 // pred_check_branch
      %22 = sbr.rel (0) target = $region13
    $region12: #{tpu_custom_call.1} parent=1 // pred_region
      %23 = dma.done [#allocation3], 512
    $region13: #{tpu_custom_call.1} parent=1 // pred_fallthru
      _
    %v24 = vld [vmem:[%s1] sm:$0xff]
    %v25 = vld [vmem:[#allocation2] sm:$0xff]
    %v26 = vld [vmem:[#allocation2 + $0x8] sm:$0xff]
    %v27 = vld [vmem:[#allocation2 + $0x10] sm:$0xff]
    %v28 = vld [vmem:[#allocation2 + $0x18] sm:$0xff]
    %v29 = vadd.f32 %v25, %v24
    %v30 = vadd.f32 %v26, %v24
    %v31 = vadd.f32 %v27, %v24
    %v32 = vadd.f32 %v28, %v24
    %33 = vst [vmem:[#allocation5] sm:$0xff] %v29
    %34 = vst [vmem:[#allocation5 + $0x8] sm:$0xff] %v30
    %35 = vst [vmem:[#allocation5 + $0x10] sm:$0xff] %v31
    %36 = vst [vmem:[#allocation5 + $0x18] sm:$0xff] %v32
    // Predicated region
    $region14: #{tpu_custom_call.1} parent=1 // pred_check
      _
    $region15: #{tpu_custom_call.1} parent=1 // pred_check_branch
      %38 = sbr.rel (0) target = $region17
    $region16: #{tpu_custom_call.1} parent=1 // pred_region
      %s40 = ssub.s32 512, 512
      %41 = vsyncadd [#allocation4], %s40
      %s43 = sshll.u32 [#allocation5], 4
      %s44 = int_to_ptr.vmem [resolvable:$true] %s43
      %46 = dma.vmem_to_hbm [thread:$0]  %s44, 512, %s2, [#allocation4]
    $region17: #{tpu_custom_call.1} parent=1 // pred_fallthru
      _
    // Predicated region
    $region18: #{tpu_custom_call.1} parent=1 // pred_check
      _
    $region19: #{tpu_custom_call.1} parent=1 // pred_check_branch
      %48 = sbr.rel (0) target = $region21
    $region20: #{tpu_custom_call.1} parent=1 // pred_region
      %49 = dma.done [#allocation4], 512
    $region21: #{tpu_custom_call.1} parent=1 // pred_fallthru
      _
    %50 = vsyncpa [#allocation3], 1
    %51 = vsyncpa [#allocation4], 1

</llo_original>
